<compile_context>
chip_gen: v6e
topology: v6e:2x2x1
jax: 0.10.0
libtpu: 0.0.40
codegen_flags: <defaults>
</compile_context>

<pallas_src>
import functools

import jax
import jax.numpy as jnp
from jax.experimental import pallas as pl
from jax.experimental.pallas import tpu as pltpu

_MIB = 1024 * 1024


def _distill_kl_kernel(ys_ref, yt_ref, out_ref, *, inv_temperature, batch_size,
                       tile_b):
    """Per-tile partial KL sum over a (tile_b, C) block of rows."""
    i = pl.program_id(0)
    inv_T = jnp.float32(inv_temperature)

    ys = ys_ref[...].astype(jnp.float32) * inv_T
    yt = yt_ref[...].astype(jnp.float32) * inv_T

    # Numerically-stable shifted logits (per row).
    ys_sh = ys - jnp.max(ys, axis=1, keepdims=True)
    yt_sh = yt - jnp.max(yt, axis=1, keepdims=True)

    # Softmax denominators (per-row column vectors).
    z_s = jnp.sum(jnp.exp(ys_sh), axis=1, keepdims=True)
    e_t = jnp.exp(yt_sh)
    z_t = jnp.sum(e_t, axis=1, keepdims=True)

    # Fused KL per row:
    #   sum_j p_t (log p_t - log p_s)
    #     = (1/z_t) * sum_j e_t * (yt_sh - ys_sh)  -  (log z_t - log z_s)
    # The per-row log difference is applied AFTER the class-axis reduction, so
    # it is never broadcast across the full tile (saves ~1 VPU op/elem).
    d = yt_sh - ys_sh
    s = jnp.sum(e_t * d, axis=1, keepdims=True)
    # Per-row reciprocal: (tile_b, 1) elements -> negligible cost; kept exact
    # because KL's cancellation (s/z_t vs. the log term) amplifies reciprocal
    # error.  Flip to approx=True only if profiling shows a VALU bottleneck.
    row_kl = s * pl.reciprocal(z_t) - (jnp.log(z_t) - jnp.log(z_s))

    # Mask rows beyond the true batch size: the last grid block may be partial
    # and its tail rows hold undefined data.  All math above is per-row, so any
    # NaN/Inf stays confined to masked rows and the select drops it.
    row_id = i * tile_b + jax.lax.broadcasted_iota(jnp.int32, row_kl.shape, 0)
    row_kl = jnp.where(row_id < batch_size, row_kl, jnp.float32(0.0))

    # Lane-dense (1, 128) output block: partial sum in lane 0, zeros elsewhere.
    total = jnp.sum(row_kl)
    lane = jax.lax.broadcasted_iota(jnp.int32, (1, 128), 1)
    out_ref[...] = jnp.where(lane == 0, total, jnp.float32(0.0))


def _tpu_vmem_capacity_bytes():
    """Best-effort VMEM capacity query; conservative (v7x) fallback."""
    try:
        info = pltpu.get_tpu_info()
        cap = getattr(info, "vmem_capacity_bytes", None)
        if cap:
            return int(cap)
    except Exception:
        pass
    return 64 * _MIB  # v7x per-TensorCore VMEM (smallest current generation)


def _plan_tiling(B, C, itemsize, tile_b=None):
    """Pick (tile_b, num_tiles, vmem_limit_bytes), generation + dtype aware."""
    vmem_cap = _tpu_vmem_capacity_bytes()
    if vmem_cap <= 80 * _MIB:
        # v7x: 64 MiB per TC -> 2 inputs x 2 pipeline buffers must stay small.
        target_block_bytes = 5 * _MIB
        limit_cap = 48 * _MIB
    else:
        # v5e / v6e: 128 MiB physical VMEM -> bigger blocks amortize the
        # ~0.35 us per-step overhead (measured ~85% of HBM roofline).
        target_block_bytes = 8 * _MIB
        limit_cap = 64 * _MIB

    if tile_b is None:
        tile_b = max(1, target_block_bytes // max(1, C * itemsize))

    if B <= 8:
        tile_b = B  # full-extent sublane dim is always a legal block
    else:
        tile_b = max(8, (min(tile_b, B) // 8) * 8)
        # Keep >= 2 tiles so both v7x TensorCores get work (harmless on
        # single-TC chips: the clamp only binds when B is small anyway).
        tile_b = min(tile_b, max(8, ((B - 1) // 8) * 8))

    num_tiles = pl.cdiv(B, tile_b)
    block_bytes = tile_b * C * itemsize
    # 2 inputs x 2 pipeline buffers + headroom, clamped per generation.
    vmem_limit = int(min(limit_cap, max(32 * _MIB, 4 * block_bytes + 8 * _MIB)))
    return tile_b, num_tiles, vmem_limit


def distill_kl(y_s, y_t, temperature, tile_b=None):
    """Pallas TPU implementation of DistillKL.forward. Returns a scalar f32.

    Pass bf16 logits straight through if the caller has them: HBM bytes are
    the roofline, and the kernel upcasts to f32 internally.
    """
    assert y_s.shape == y_t.shape and y_s.ndim == 2
    B, C = y_s.shape
    T = float(temperature)
    itemsize = jnp.dtype(y_s.dtype).itemsize

    tile_b, num_tiles, vmem_limit = _plan_tiling(B, C, itemsize, tile_b)

    kernel = functools.partial(
        _distill_kl_kernel,
        inv_temperature=1.0 / T,
        batch_size=B,
        tile_b=tile_b,
    )

    cost = pl.CostEstimate(
        flops=10 * B * C,
        transcendentals=2 * B * C,  # two exps per element; logs/recip are per-row
        bytes_accessed=2 * B * C * itemsize + num_tiles * 128 * 4,
    )

    partials = pl.pallas_call(
        kernel,
        out_shape=jax.ShapeDtypeStruct((num_tiles, 128), jnp.float32),
        grid_spec=pltpu.PrefetchScalarGridSpec(
            num_scalar_prefetch=0,
            grid=(num_tiles,),
            # Double-buffered streaming of both logit blocks.  Add
            # pipeline_mode=pl.Buffered(3) only if profiling shows exposed DMA.
            in_specs=[
                pl.BlockSpec((tile_b, C), lambda i: (i, 0)),
                pl.BlockSpec((tile_b, C), lambda i: (i, 0)),
            ],
            out_specs=pl.BlockSpec((1, 128), lambda i: (i, 0)),
        ),
        compiler_params=pltpu.CompilerParams(
            dimension_semantics=("parallel",),  # megacore-shard tiles on v7x
            vmem_limit_bytes=vmem_limit,
        ),
        cost_estimate=cost,
    )(y_s, y_t)

    # Tiny scalar epilogue in JAX: per-tile partials live in lane 0 (zeros
    # elsewhere), so a plain sum is exact; then apply T^2 / B.
    return jnp.sum(partials) * (T * T) / B


def _distill_kl_ref(y_s, y_t, T):
    """Pure-JAX reference (f32 compute, matching the kernel's internal dtype)."""
    y_s = y_s.astype(jnp.float32)
    y_t = y_t.astype(jnp.float32)
    log_p_s = jax.nn.log_softmax(y_s / T, axis=1)
    p_t = jax.nn.softmax(y_t / T, axis=1)
    log_p_t = jax.nn.log_softmax(y_t / T, axis=1)
    return jnp.sum(p_t * (log_p_t - log_p_s)) * (T ** 2) / y_s.shape[0]


if __name__ == "__main__":
    key = jax.random.PRNGKey(0)
    k1, k2, k3, k4, k5, k6 = jax.random.split(key, 6)

    T = 4.0  # distillation temperature (module __init__ arg)

    # Case 1: small (batch, num_classes) consistent with KD usage; single tile.
    y_s1 = jax.random.normal(k1, (8, 32), dtype=jnp.float32)
    y_t1 = jax.random.normal(k2, (8, 32), dtype=jnp.float32)
    loss1 = jax.block_until_ready(distill_kl(y_s1, y_t1, T))
    ref1 = _distill_kl_ref(y_s1, y_t1, T)
    assert jnp.allclose(loss1, ref1, rtol=1e-4, atol=1e-6), (loss1, ref1)

    # Case 2: batch not divisible by the tile -> partial last block + in-kernel
    # row mask (no wrapper-side padding anymore) and multi-tile parallel grid.
    y_s2 = jax.random.normal(k3, (20, 160), dtype=jnp.float32)
    y_t2 = jax.random.normal(k4, (20, 160), dtype=jnp.float32)
    loss2 = jax.block_until_ready(distill_kl(y_s2, y_t2, T, tile_b=16))
    ref2 = _distill_kl_ref(y_s2, y_t2, T)
    assert jnp.allclose(loss2, ref2, rtol=1e-4, atol=1e-6), (loss2, ref2)

    # Case 3: bf16 logits pass straight through (half the HBM traffic); compute
    # stays f32 in-kernel.  Auto tile sizing picks >= 2 tiles here.
    y_s3 = jax.random.normal(k5, (24, 384), dtype=jnp.float32).astype(jnp.bfloat16)
    y_t3 = jax.random.normal(k6, (24, 384), dtype=jnp.float32).astype(jnp.bfloat16)
    loss3 = jax.block_until_ready(distill_kl(y_s3, y_t3, T))
    ref3 = _distill_kl_ref(y_s3, y_t3, T)
    assert jnp.allclose(loss3, ref3, rtol=1e-4, atol=1e-6), (loss3, ref3)

    print("KERNEL_OK")
</pallas_src>

<mosaic_0001>
module attributes {stable_mosaic.version = 11 : i64} {
  func.func @_distill_kl_kernel(%arg0: i32, %arg1: memref<8x32xf32, #tpu.memory_space<vmem>>, %arg2: memref<8x32xf32, #tpu.memory_space<vmem>>, %arg3: memref<1x128xf32, #tpu.memory_space<vmem>>) attributes {dimension_semantics = [#tpu.dimension_semantics<parallel>], iteration_bounds = array<i64: 1>, scalar_prefetch = 0 : i64, scratch_operands = 0 : i64, tpu.core_type = #tpu.core_type<tc>, window_params = [{transform_indices = @transform_0, window_bounds = array<i64: 8, 32>}, {transform_indices = @transform_1, window_bounds = array<i64: 8, 32>}, {transform_indices = @transform_2, window_bounds = array<i64: 1, 128>}]} {
    %c0 = arith.constant 0 : index
    %c0_0 = arith.constant 0 : index
    %0 = vector.load %arg1[%c0, %c0_0] : memref<8x32xf32, #tpu.memory_space<vmem>>, vector<8x32xf32>
    %cst = arith.constant 2.500000e-01 : f32
    %1 = vector.broadcast %cst : f32 to vector<8x32xf32>
    %2 = arith.mulf %0, %1 : vector<8x32xf32>
    %c0_1 = arith.constant 0 : index
    %c0_2 = arith.constant 0 : index
    %3 = vector.load %arg2[%c0_1, %c0_2] : memref<8x32xf32, #tpu.memory_space<vmem>>, vector<8x32xf32>
    %cst_3 = arith.constant 2.500000e-01 : f32
    %4 = vector.broadcast %cst_3 : f32 to vector<8x32xf32>
    %5 = arith.mulf %3, %4 : vector<8x32xf32>
    %cst_4 = arith.constant dense<0xFF800000> : vector<8xf32>
    %6 = vector.multi_reduction <maximumf>, %2, %cst_4 [1] : vector<8x32xf32> to vector<8xf32>
    %7 = vector.shape_cast %6 : vector<8xf32> to vector<8x1xf32>
    %8 = vector.broadcast %7 : vector<8x1xf32> to vector<8x32xf32>
    %9 = arith.subf %2, %8 : vector<8x32xf32>
    %cst_5 = arith.constant dense<0xFF800000> : vector<8xf32>
    %10 = vector.multi_reduction <maximumf>, %5, %cst_5 [1] : vector<8x32xf32> to vector<8xf32>
    %11 = vector.shape_cast %10 : vector<8xf32> to vector<8x1xf32>
    %12 = vector.broadcast %11 : vector<8x1xf32> to vector<8x32xf32>
    %13 = arith.subf %5, %12 : vector<8x32xf32>
    %14 = math.exp %9 : vector<8x32xf32>
    %cst_6 = arith.constant dense<0.000000e+00> : vector<8xf32>
    %15 = vector.multi_reduction <add>, %14, %cst_6 [1] : vector<8x32xf32> to vector<8xf32>
    %16 = vector.shape_cast %15 : vector<8xf32> to vector<8x1xf32>
    %17 = math.exp %13 : vector<8x32xf32>
    %cst_7 = arith.constant dense<0.000000e+00> : vector<8xf32>
    %18 = vector.multi_reduction <add>, %17, %cst_7 [1] : vector<8x32xf32> to vector<8xf32>
    %19 = vector.shape_cast %18 : vector<8xf32> to vector<8x1xf32>
    %20 = arith.subf %13, %9 : vector<8x32xf32>
    %21 = arith.mulf %17, %20 : vector<8x32xf32>
    %cst_8 = arith.constant dense<0.000000e+00> : vector<8xf32>
    %22 = vector.multi_reduction <add>, %21, %cst_8 [1] : vector<8x32xf32> to vector<8xf32>
    %23 = vector.shape_cast %22 : vector<8xf32> to vector<8x1xf32>
    %24 = tpu.reciprocal %19 : vector<8x1xf32> -> vector<8x1xf32>
    %25 = arith.mulf %23, %24 : vector<8x1xf32>
    %26 = math.log %19 : vector<8x1xf32>
    %27 = math.log %16 : vector<8x1xf32>
    %28 = arith.subf %26, %27 : vector<8x1xf32>
    %29 = arith.subf %25, %28 : vector<8x1xf32>
    %c8_i32 = arith.constant 8 : i32
    %30 = arith.muli %arg0, %c8_i32 : i32
    %31 = tpu.iota {dimensions = array<i32: 0>} : vector<8x1xi32>
    %32 = vector.broadcast %30 : i32 to vector<8x1xi32>
    %33 = arith.addi %32, %31 : vector<8x1xi32>
    %c8_i32_9 = arith.constant 8 : i32
    %34 = vector.broadcast %c8_i32_9 : i32 to vector<8x1xi32>
    %35 = arith.cmpi slt, %33, %34 : vector<8x1xi32>
    %cst_10 = arith.constant 0.000000e+00 : f32
    %36 = vector.broadcast %cst_10 : f32 to vector<8x1xf32>
    %37 = arith.select %35, %29, %36 : vector<8x1xi1>, vector<8x1xf32>
    %38 = vector.shape_cast %37 : vector<8x1xf32> to vector<1x8x1xf32>
    %cst_11 = arith.constant dense<0.000000e+00> : vector<1xf32>
    %39 = vector.multi_reduction <add>, %38, %cst_11 [1, 2] : vector<1x8x1xf32> to vector<1xf32>
    %40 = vector.shape_cast %39 : vector<1xf32> to vector<1x1x1xf32>
    %41 = vector.extract %40[0, 0, 0] : f32 from vector<1x1x1xf32>
    %42 = tpu.iota {dimensions = array<i32: 1>} : vector<1x128xi32>
    %c0_i32 = arith.constant 0 : i32
    %43 = vector.broadcast %c0_i32 : i32 to vector<1x128xi32>
    %44 = arith.cmpi eq, %42, %43 : vector<1x128xi32>
    %cst_12 = arith.constant 0.000000e+00 : f32
    %45 = vector.broadcast %41 : f32 to vector<1x128xf32>
    %46 = vector.broadcast %cst_12 : f32 to vector<1x128xf32>
    %47 = arith.select %44, %45, %46 : vector<1x128xi1>, vector<1x128xf32>
    %c0_13 = arith.constant 0 : index
    %c0_14 = arith.constant 0 : index
    %48 = vector.load %arg3[%c0_13, %c0_14] : memref<1x128xf32, #tpu.memory_space<vmem>>, vector<1x128xf32>
    tpu.vector_store %arg3[%c0_13, %c0_14], %47 {strides = array<i32>} : memref<1x128xf32, #tpu.memory_space<vmem>>, vector<1x128xf32>,
    return
  }
  func.func @transform_0(%arg0: i32) -> (i32, i32) {
    %c0_i32 = arith.constant 0 : i32
    %c0_i32_0 = arith.constant 0 : i32
    return %arg0, %c0_i32 : i32, i32
  }
  func.func @transform_1(%arg0: i32) -> (i32, i32) {
    %c0_i32 = arith.constant 0 : i32
    %c0_i32_0 = arith.constant 0 : i32
    return %arg0, %c0_i32 : i32, i32
  }
  func.func @transform_2(%arg0: i32) -> (i32, i32) {
    %c0_i32 = arith.constant 0 : i32
    %c0_i32_0 = arith.constant 0 : i32
    return %arg0, %c0_i32 : i32, i32
  }
}

</mosaic_0001>

<llo_original>
// kernel: tpu_custom_call.1
$region0: #{tpu_custom_call.1}
  #allocation0 [shape = 'u32[]', space=smem, size = 0x4, offset = 0x4, fixed_abs, tag = 'smem constant byte address 0x4 - core index']
  #allocation1 [shape = 'u32[144,128]{1,0:T(1,128)}', space=vmem, size = 0x12000, scoped, tag = 'internal scratch']
  %s0 = inlined_call_operand.hbm [shape: f32[8,32], index: 0, kind: input, shape index: {}]
  %s1 = inlined_call_operand.hbm [shape: f32[8,32], index: 1, kind: input, shape index: {}]
  %s2 = inlined_call_operand.hbm [shape: f32[1,128], index: 2, kind: output, shape index: {}]
  %s3 = sld [smem:[#allocation0]]
  $region26: #{tpu_custom_call.1} parent=0
    _
  %s5 = ssub.s32 1, %s3
  %s6 = scalar_select 0, %s5, %s3
  $region1: #{tpu_custom_call.1} parent=0
    #allocation2 [shape = 'u8[4096]{0}', space=vmem, size = 0x1000, scoped, tag = 'input window, operand 0, single buffered']
    #allocation3 [shape = 's32[1]{0}', space=sflag, size = 0x4, scoped, tag = 'scoped memory for tpu_custom_call.1']
    #allocation4 [shape = 's32[1]{0}', space=sflag, size = 0x4, scoped, tag = 'scoped memory for tpu_custom_call.1']
    #allocation5 [shape = 'u8[4096]{0}', space=vmem, size = 0x1000, scoped, tag = 'input window, operand 1, single buffered']
    #allocation6 [shape = 's32[1]{0}', space=sflag, size = 0x4, scoped, tag = 'scoped memory for tpu_custom_call.1']
    #allocation7 [shape = 'u8[512]{0}', space=vmem, size = 0x400, scoped, tag = 'output window, operand 0, single buffered']
    %7 = vsyncpa [#allocation3], 0
    %8 = vsyncpa [#allocation6], 0
    %9 = vsyncpa [#allocation4], 0
    // Predicated region
    $region2: #{tpu_custom_call.1} parent=1 // pred_check
      _
    $region3: #{tpu_custom_call.1} parent=1 // pred_check_branch
      %11 = sbr.rel (0) target = $region5
    $region4: #{tpu_custom_call.1} parent=1 // pred_region
      %s13 = ssub.s32 128, 128
      %14 = vsyncadd [#allocation3], %s13
      %s16 = sshll.u32 [#allocation2], 4
      %s17 = int_to_ptr.vmem [resolvable:$true] %s16
      %19 = dma.hbm_to_vmem [thread:$0]  %s0, 128, %s17, [#allocation3]
    $region5: #{tpu_custom_call.1} parent=1 // pred_fallthru
      _
    // Predicated region
    $region6: #{tpu_custom_call.1} parent=1 // pred_check
      _
    $region7: #{tpu_custom_call.1} parent=1 // pred_check_branch
      %21 = sbr.rel (0) target = $region9
    $region8: #{tpu_custom_call.1} parent=1 // pred_region
      %s23 = ssub.s32 128, 128
      %24 = vsyncadd [#allocation6], %s23
      %s26 = sshll.u32 [#allocation5], 4
      %s27 = int_to_ptr.vmem [resolvable:$true] %s26
      %29 = dma.hbm_to_vmem [thread:$0]  %s1, 128, %s27, [#allocation6]
    $region9: #{tpu_custom_call.1} parent=1 // pred_fallthru
      _
    // Predicated region
    $region10: #{tpu_custom_call.1} parent=1 // pred_check
      _
    $region11: #{tpu_custom_call.1} parent=1 // pred_check_branch
      %31 = sbr.rel (0) target = $region13
    $region12: #{tpu_custom_call.1} parent=1 // pred_region
      %32 = dma.done [#allocation3], 128
    $region13: #{tpu_custom_call.1} parent=1 // pred_fallthru
      _
    // Predicated region
    $region14: #{tpu_custom_call.1} parent=1 // pred_check
      _
    $region15: #{tpu_custom_call.1} parent=1 // pred_check_branch
      %34 = sbr.rel (0) target = $region17
    $region16: #{tpu_custom_call.1} parent=1 // pred_region
      %35 = dma.done [#allocation6], 128
    $region17: #{tpu_custom_call.1} parent=1 // pred_fallthru
      _
    %v36 = vld [vmem:[#allocation2] sm:$0xff]
    %v37 = vmul.f32 %v36, 0.25
    %v38 = vld [vmem:[#allocation5] sm:$0xff]
    %v39 = vmul.f32 %v38, 0.25
    %vm40 = vcmask 261120
    %v41 = vsel %vm40, %v37, -inf
    %42 = vmax.xlane.f32.xlu0 %v41
    %v43 = vpop.xlane.xlu0 %42
    %v44 = vsub.f32 %v37, %v43
    %v45 = vsel %vm40, %v39, -inf
    %46 = vmax.xlane.f32.xlu0 %v45
    %v47 = vpop.xlane.xlu0 %46
    %v48 = vsub.f32 %v39, %v47
    %v49 = vmul.f32 %v44, 1.442695
    %v50 = vpow.pop %v49
    %v51 = vsel %vm40, %v50, 0.0
    %52 = vadd.xlane.f32.xlu0 %v51
    %v53 = vpop.xlane.xlu0 %52
    %v54 = vmul.f32 %v48, 1.442695
    %v55 = vpow.pop %v54
    %v56 = vsel %vm40, %v55, 0.0
    %57 = vadd.xlane.f32.xlu0 %v56
    %v58 = vpop.xlane.xlu0 %57
    %v59 = vsub.f32 %v48, %v44
    %v60 = vmul.f32 %v55, %v59
    %v61 = vsel %vm40, %v60, 0.0
    %62 = vadd.xlane.f32.xlu0 %v61
    %v63 = vpop.xlane.xlu0 %62
    %v64 = vrcp.pop %v58
    %v65 = vmul.f32 %v63, %v64
    %v66 = vlog2.pop %v58
    %v67 = vmul.f32 %v66, 0.6931472
    %v68 = vlog2.pop %v53
    %v69 = vmul.f32 %v68, 0.6931472
    %v70 = vsub.f32 %v67, %v69
    %v71 = vsub.f32 %v65, %v70
    %s72 = smul.u32 0, 8
    %v73 = vlaneseq
    %v74 = vshrl.u32 %v73, 7
    %v75 = vstv %s72
    %v76 = vadd.s32 %v75, %v74
    %vm77 = vcmp.lt.s32.totalorder %v76, 8
    %v78 = vsel %vm77, %v71, 0.0
    %vm79 = vcmask 7168
    %v80 = vsel %vm79, %v78, 0.0
    %81 = vadd.xlane.f32.xlu0 %v80
    %v82 = vpop.xlane.xlu0 %81
    %v83 = vrot.slane %v82, 4
    %v84 = vadd.f32 %v82, %v83
    %v85 = vrot.slane %v84, 2
    %v86 = vadd.f32 %v84, %v85
    %v87 = vrot.slane %v86, 1
    %v88 = vadd.f32 %v86, %v87
    %s89 = vtos %v88
    %v90 = vlaneseq
    %v91 = vand.u32 %v90, 127
    %vm92 = vcmp.eq.s32.totalorder %v91, 0
    %v93 = vstv %s89
    %v94 = vsel %vm92, %v93, 0.0
    %95 = vst [vmem:[#allocation7] sm:$0x1] %v94
    // Predicated region
    $region18: #{tpu_custom_call.1} parent=1 // pred_check
      _
    $region19: #{tpu_custom_call.1} parent=1 // pred_check_branch
      %97 = sbr.rel (0) target = $region21
    $region20: #{tpu_custom_call.1} parent=1 // pred_region
      %s99 = ssub.s32 16, 16
      %100 = vsyncadd [#allocation4], %s99
      %s102 = sshll.u32 [#allocation7], 4
      %s103 = int_to_ptr.vmem [resolvable:$true] %s102
      %105 = dma.vmem_to_hbm [thread:$0]  %s103, 16, %s2, [#allocation4]
    $region21: #{tpu_custom_call.1} parent=1 // pred_fallthru
      _
    // Predicated region
    $region22: #{tpu_custom_call.1} parent=1 // pred_check
      _
    $region23: #{tpu_custom_call.1} parent=1 // pred_check_branch
      %107 = sbr.rel (0) target = $region25
    $region24: #{tpu_custom_call.1} parent=1 // pred_region
      %108 = dma.done [#allocation4], 16
    $region25: #{tpu_custom_call.1} parent=1 // pred_fallthru
      _
    %109 = vsyncpa [#allocation3], 1
    %110 = vsyncpa [#allocation6], 1
    %111 = vsyncpa [#allocation4], 1

</llo_original>
